<compile_context>
chip_gen: v6e
topology: v6e:2x2x1
jax: 0.10.0
libtpu: 0.0.40
codegen_flags: <defaults>
</compile_context>

<pallas_src>
import math
import functools

import jax
import jax.numpy as jnp
from jax.experimental import pallas as pl
from jax.experimental.pallas import tpu as pltpu


# ----------------------------------------------------------------------------- kernel
def _ohem_ce_kernel(logits_ref, labels_ref, loss_ref, stats_ref, *, thresh, ignore_label):
    """One (batch n, pixel-tile i) grid step.

    logits_ref : (C, TILE)  native dtype      labels_ref : (1, TILE) integer
    loss_ref   : (1, TILE)  f32 per-pixel loss (0 at ignored / padded pixels)
    stats_ref  : (1, 128)   f32 per-tile partials:
                 lane 0 = hard_sum, lane 1 = hard_cnt, lane 2 = valid_cnt, rest 0.
    """
    # TODO(synk): optional bf16 softmax inner loop for bf16 preds on v6e/v7x (f32
    # accumulation); kept full-f32 here so numerics are exact on every generation.
    x = logits_ref[...].astype(jnp.float32)                  # widen in-register
    lbl = labels_ref[...].astype(jnp.int32)                  # widen in-register

    # stable log-sum-exp over the class (sublane) axis
    m = jnp.max(x, axis=0, keepdims=True)                    # (1, TILE)
    lse = jnp.log(jnp.sum(jnp.exp(x - m), axis=0, keepdims=True)) + m

    # gather the target-class logit via a one-hot select over classes
    cls_iota = jax.lax.broadcasted_iota(jnp.int32, x.shape, 0)       # (C, TILE)
    picked = jnp.sum(jnp.where(cls_iota == lbl, x, 0.0), axis=0, keepdims=True)

    valid = lbl != ignore_label
    loss = jnp.where(valid, lse - picked, 0.0)                # (1, TILE)
    loss_ref[...] = loss                                      # lane-dense vst

    # "hard example" partials (thresh > 0 => ignored/padded pixels never count)
    hard = loss > thresh
    hard_sum = jnp.sum(jnp.where(hard, loss, 0.0))
    hard_cnt = jnp.sum(hard.astype(jnp.float32))
    valid_cnt = jnp.sum(valid.astype(jnp.float32))            # exact for TILE <= 2^24

    lane = jax.lax.broadcasted_iota(jnp.int32, (1, 128), 1)
    stats_ref[...] = (jnp.where(lane == 0, hard_sum, 0.0)
                      + jnp.where(lane == 1, hard_cnt, 0.0)
                      + jnp.where(lane == 2, valid_cnt, 0.0))


# ------------------------------------------------------------------- sizing helpers
def _vmem_capacity_bytes():
    try:
        cap = getattr(pltpu.get_tpu_info(), "vmem_capacity_bytes", None)
        if cap:
            return int(cap)
    except Exception:
        pass
    return 64 << 20  # conservative fallback: v7x per-TensorCore VMEM


def _per_lane_bytes(C, logit_itemsize, label_itemsize):
    # Double-buffered logits / labels / loss blocks + f32 compiler temporaries
    # (widened x, exp(x - m), class iota) + a handful of (1, TILE) f32 rows.
    return (2 * C * logit_itemsize + 2 * label_itemsize + 2 * 4
            + 3 * C * 4 + 8 * 4)


def _pick_tile(HW, per_lane, budget_bytes, max_tile):
    """Largest lane-multiple-of-128 tile that fits the VMEM budget, rebalanced so
    the padded tail wastes < 128 lanes per tile."""
    tile = max(128, min(max_tile, (budget_bytes // per_lane) // 128 * 128))
    hw128 = -(-HW // 128) * 128
    if tile >= hw128:
        return hw128
    num_tiles = -(-HW // tile)
    return -(-HW // (num_tiles * 128)) * 128


# ---------------------------------------------------------------------- pallas glue
def _per_pixel_loss(logits, labels, thresh_val, ignore_label, tile):
    """logits: (N, C, HW_pad) native dtype; labels: (N, 1, HW_pad) integer dtype."""
    N, C, HW = logits.shape
    assert HW % tile == 0
    num_tiles = HW // tile

    kernel = functools.partial(_ohem_ce_kernel, thresh=thresh_val,
                               ignore_label=ignore_label)

    per_lane = _per_lane_bytes(C, jnp.dtype(logits.dtype).itemsize,
                               jnp.dtype(labels.dtype).itemsize)
    footprint = per_lane * tile + 2 * 128 * 4
    vmem_cap = _vmem_capacity_bytes()
    vmem_limit = int(min(max(footprint + (4 << 20), 16 << 20),
                         min(96 << 20, int(vmem_cap * 0.75))))

    loss, stats = pl.pallas_call(
        kernel,
        out_shape=(jax.ShapeDtypeStruct((N, 1, HW), jnp.float32),
                   jax.ShapeDtypeStruct((N, 1, num_tiles * 128), jnp.float32)),
        grid_spec=pltpu.PrefetchScalarGridSpec(
            num_scalar_prefetch=0,
            grid=(N, num_tiles),
            in_specs=[pl.BlockSpec((None, C, tile), lambda n, i: (n, 0, i)),
                      pl.BlockSpec((None, 1, tile), lambda n, i: (n, 0, i))],
            out_specs=[pl.BlockSpec((None, 1, tile), lambda n, i: (n, 0, i)),
                       pl.BlockSpec((None, 1, 128), lambda n, i: (n, 0, i))]),
        compiler_params=pltpu.CompilerParams(
            dimension_semantics=("parallel", "parallel"),
            vmem_limit_bytes=vmem_limit),
    )(logits, labels)
    return loss, stats


def ohem_forward_single(preds, labels, ignore_label=255, thresh=0.7, max_tile=65536):
    """Equivalent of OhemCrossEntropy._forward for a single NCHW prediction."""
    # TODO(synk): per-class `weight` of nn.CrossEntropyLoss is not supported (default None).
    assert 0.0 < thresh < 1.0, "thresh must be in (0, 1) so that -log(thresh) > 0"
    N, C, H, W = preds.shape
    HW = H * W
    thresh_val = float(-math.log(thresh))

    logits = preds.reshape(N, C, HW)                      # free reshape, native dtype
    labels_p = labels.reshape(N, 1, HW)
    if (not jnp.issubdtype(labels_p.dtype, jnp.integer)
            or jnp.iinfo(labels_p.dtype).bits > 32
            or not (jnp.iinfo(labels_p.dtype).min <= ignore_label
                    <= jnp.iinfo(labels_p.dtype).max)):
        labels_p = labels_p.astype(jnp.int32)
    # (uint8 / int16 / int32 labels flow through untouched; widened in-kernel)

    per_lane = _per_lane_bytes(C, jnp.dtype(logits.dtype).itemsize,
                               jnp.dtype(labels_p.dtype).itemsize)
    vmem_cap = _vmem_capacity_bytes()
    tile = _pick_tile(HW, per_lane, min(int(vmem_cap * 0.5), 80 << 20), max_tile)
    HW_pad = -(-HW // tile) * tile

    if HW_pad != HW:
        logits = jnp.pad(logits, ((0, 0), (0, 0), (0, HW_pad - HW)))
        labels_p = jnp.pad(labels_p, ((0, 0), (0, 0), (0, HW_pad - HW)),
                           constant_values=ignore_label)

    loss, stats = _per_pixel_loss(logits, labels_p, thresh_val, ignore_label, tile)

    loss_flat = loss.reshape(-1)                          # padded losses are exactly 0
    stats = stats.reshape(N, HW_pad // tile, 128)
    hard_sum = jnp.sum(stats[..., 0])                     # pairwise-ish over tiles
    hard_cnt = jnp.sum(stats[..., 1])
    n_valid = jnp.sum(stats[..., 2].astype(jnp.int32))    # exact (per-tile cnt <= tile)
    n_min = n_valid // 16

    def _mean_hard(_):
        return hard_sum / jnp.maximum(hard_cnt, 1.0)      # guarded denominator

    def _mean_topk(_):
        # TODO(synk): an in-kernel histogram selection would avoid this O(P log P)
        # sort; it is kept exact here and only executed when the fallback triggers.
        sorted_desc = -jnp.sort(-loss_flat)
        topk_sum = jnp.sum(jnp.where(jnp.arange(loss_flat.shape[0]) < n_min,
                                     sorted_desc, 0.0))
        return topk_sum / jnp.maximum(n_min, 1).astype(jnp.float32)

    # NOTE: PyTorch branches on `loss_hard.numel() < n_min`; in the tie case
    # (hard_cnt == n_min) both branches reduce to the same mean, so this matches.
    return jax.lax.cond(hard_cnt < n_min.astype(jnp.float32),
                        _mean_topk, _mean_hard, None)


def ohem_cross_entropy(preds, labels, ignore_label=255, thresh=0.7, aux_weights=(1, 1)):
    """Equivalent of OhemCrossEntropy.forward (handles tuple of predictions)."""
    if isinstance(preds, (tuple, list)):
        total = 0.0
        for p, w in zip(preds, aux_weights):
            total = total + w * ohem_forward_single(p, labels, ignore_label, thresh)
        return total
    return ohem_forward_single(preds, labels, ignore_label, thresh)


# ------------------------------------------------------------------------- reference
def _reference_ohem(preds, labels, ignore_label=255, thresh=0.7):
    """Pure-JAX reference mirroring the PyTorch module, for a sanity check."""
    N, C, H, W = preds.shape
    logp = jax.nn.log_softmax(preds.astype(jnp.float32), axis=1)
    valid = labels != ignore_label
    lbl_c = jnp.clip(labels, 0, C - 1)
    picked = jnp.take_along_axis(logp, lbl_c[:, None], axis=1)[:, 0]
    loss = jnp.where(valid, -picked, 0.0).reshape(-1)
    thresh_val = -math.log(thresh)
    n_min = jnp.sum(valid) // 16
    hard = loss > thresh_val
    hard_cnt = jnp.sum(hard)
    mean_hard = jnp.sum(jnp.where(hard, loss, 0.0)) / jnp.maximum(hard_cnt, 1).astype(jnp.float32)
    sorted_desc = -jnp.sort(-loss)
    topk_sum = jnp.sum(jnp.where(jnp.arange(loss.shape[0]) < n_min, sorted_desc, 0.0))
    mean_topk = topk_sum / jnp.maximum(n_min, 1).astype(jnp.float32)
    return jnp.where(hard_cnt < n_min, mean_topk, mean_hard)


if __name__ == "__main__":
    key = jax.random.PRNGKey(0)
    k1, k2, k3 = jax.random.split(key, 3)

    N, C, H, W = 2, 4, 16, 16
    preds = jax.random.normal(k1, (N, C, H, W), dtype=jnp.float32) * 2.0
    labels = jax.random.randint(k2, (N, H, W), 0, C, dtype=jnp.int32)
    # sprinkle some ignore_label pixels
    ignore_mask = jax.random.uniform(k3, (N, H, W)) < 0.1
    labels = jnp.where(ignore_mask, 255, labels)

    out = ohem_cross_entropy(preds, labels)
    out = jax.block_until_ready(out)

    ref = _reference_ohem(preds, labels)
    assert jnp.allclose(out, ref, rtol=1e-4, atol=1e-5), (out, ref)

    print("KERNEL_OK")
</pallas_src>

<mosaic_0001>
module attributes {stable_mosaic.version = 11 : i64} {
  func.func @_ohem_ce_kernel(%arg0: i32, %arg1: i32, %arg2: memref<1x4x256xf32, #tpu.memory_space<vmem>>, %arg3: memref<1x1x256xi32, #tpu.memory_space<vmem>>, %arg4: memref<1x1x256xf32, #tpu.memory_space<vmem>>, %arg5: memref<1x1x128xf32, #tpu.memory_space<vmem>>) attributes {dimension_semantics = [#tpu.dimension_semantics<parallel>, #tpu.dimension_semantics<parallel>], iteration_bounds = array<i64: 2, 1>, scalar_prefetch = 0 : i64, scratch_operands = 0 : i64, tpu.core_type = #tpu.core_type<tc>, window_params = [{transform_indices = @transform_0, window_bounds = array<i64: 1, 4, 256>}, {transform_indices = @transform_1, window_bounds = array<i64: 1, 1, 256>}, {transform_indices = @transform_2, window_bounds = array<i64: 1, 1, 256>}, {transform_indices = @transform_3, window_bounds = array<i64: 1, 1, 128>}]} {
    %c0 = arith.constant 0 : index
    %c0_0 = arith.constant 0 : index
    %c0_1 = arith.constant 0 : index
    %0 = vector.load %arg2[%c0, %c0_0, %c0_1] : memref<1x4x256xf32, #tpu.memory_space<vmem>>, vector<1x4x256xf32>
    %1 = vector.shape_cast %0 : vector<1x4x256xf32> to vector<4x256xf32>
    %c0_2 = arith.constant 0 : index
    %c0_3 = arith.constant 0 : index
    %c0_4 = arith.constant 0 : index
    %2 = vector.load %arg3[%c0_2, %c0_3, %c0_4] : memref<1x1x256xi32, #tpu.memory_space<vmem>>, vector<1x1x256xi32>
    %3 = vector.shape_cast %2 : vector<1x1x256xi32> to vector<1x256xi32>
    %cst = arith.constant dense<0xFF800000> : vector<256xf32>
    %4 = vector.multi_reduction <maximumf>, %1, %cst [0] : vector<4x256xf32> to vector<256xf32>
    %5 = vector.shape_cast %4 : vector<256xf32> to vector<1x256xf32>
    %6 = vector.broadcast %5 : vector<1x256xf32> to vector<4x256xf32>
    %7 = arith.subf %1, %6 : vector<4x256xf32>
    %8 = math.exp %7 : vector<4x256xf32>
    %cst_5 = arith.constant dense<0.000000e+00> : vector<256xf32>
    %9 = vector.multi_reduction <add>, %8, %cst_5 [0] : vector<4x256xf32> to vector<256xf32>
    %10 = vector.shape_cast %9 : vector<256xf32> to vector<1x256xf32>
    %11 = math.log %10 : vector<1x256xf32>
    %12 = arith.addf %11, %5 : vector<1x256xf32>
    %13 = tpu.iota {dimensions = array<i32: 0>} : vector<4x256xi32>
    %14 = vector.broadcast %3 : vector<1x256xi32> to vector<4x256xi32>
    %15 = arith.cmpi eq, %13, %14 : vector<4x256xi32>
    %cst_6 = arith.constant 0.000000e+00 : f32
    %16 = vector.broadcast %cst_6 : f32 to vector<4x256xf32>
    %17 = arith.select %15, %1, %16 : vector<4x256xi1>, vector<4x256xf32>
    %cst_7 = arith.constant dense<0.000000e+00> : vector<256xf32>
    %18 = vector.multi_reduction <add>, %17, %cst_7 [0] : vector<4x256xf32> to vector<256xf32>
    %19 = vector.shape_cast %18 : vector<256xf32> to vector<1x256xf32>
    %c255_i32 = arith.constant 255 : i32
    %20 = vector.broadcast %c255_i32 : i32 to vector<1x256xi32>
    %21 = arith.cmpi ne, %3, %20 : vector<1x256xi32>
    %22 = arith.subf %12, %19 : vector<1x256xf32>
    %cst_8 = arith.constant 0.000000e+00 : f32
    %23 = vector.broadcast %cst_8 : f32 to vector<1x256xf32>
    %24 = arith.select %21, %22, %23 : vector<1x256xi1>, vector<1x256xf32>
    %c0_9 = arith.constant 0 : index
    %c0_10 = arith.constant 0 : index
    %c0_11 = arith.constant 0 : index
    %25 = vector.load %arg4[%c0_9, %c0_10, %c0_11] : memref<1x1x256xf32, #tpu.memory_space<vmem>>, vector<1x1x256xf32>
    %26 = vector.shape_cast %25 : vector<1x1x256xf32> to vector<1x256xf32>
    %27 = vector.shape_cast %24 : vector<1x256xf32> to vector<1x1x256xf32>
    tpu.vector_store %arg4[%c0_9, %c0_10, %c0_11], %27 {strides = array<i32>} : memref<1x1x256xf32, #tpu.memory_space<vmem>>, vector<1x1x256xf32>,
    %cst_12 = arith.constant 0.356674939 : f32
    %28 = vector.broadcast %cst_12 : f32 to vector<1x256xf32>
    %29 = arith.cmpf ogt, %24, %28 : vector<1x256xf32>
    %cst_13 = arith.constant 0.000000e+00 : f32
    %30 = vector.broadcast %cst_13 : f32 to vector<1x256xf32>
    %31 = arith.select %29, %24, %30 : vector<1x256xi1>, vector<1x256xf32>
    %32 = vector.shape_cast %31 : vector<1x256xf32> to vector<1x1x256xf32>
    %cst_14 = arith.constant dense<0.000000e+00> : vector<1xf32>
    %33 = vector.multi_reduction <add>, %32, %cst_14 [1, 2] : vector<1x1x256xf32> to vector<1xf32>
    %34 = vector.shape_cast %33 : vector<1xf32> to vector<1x1x1xf32>
    %35 = vector.extract %34[0, 0, 0] : f32 from vector<1x1x1xf32>
    %36 = arith.extui %29 : vector<1x256xi1> to vector<1x256xi32>
    %37 = arith.sitofp %36 : vector<1x256xi32> to vector<1x256xf32>
    %38 = vector.shape_cast %37 : vector<1x256xf32> to vector<1x1x256xf32>
    %cst_15 = arith.constant dense<0.000000e+00> : vector<1xf32>
    %39 = vector.multi_reduction <add>, %38, %cst_15 [1, 2] : vector<1x1x256xf32> to vector<1xf32>
    %40 = vector.shape_cast %39 : vector<1xf32> to vector<1x1x1xf32>
    %41 = vector.extract %40[0, 0, 0] : f32 from vector<1x1x1xf32>
    %42 = arith.extui %21 : vector<1x256xi1> to vector<1x256xi32>
    %43 = arith.sitofp %42 : vector<1x256xi32> to vector<1x256xf32>
    %44 = vector.shape_cast %43 : vector<1x256xf32> to vector<1x1x256xf32>
    %cst_16 = arith.constant dense<0.000000e+00> : vector<1xf32>
    %45 = vector.multi_reduction <add>, %44, %cst_16 [1, 2] : vector<1x1x256xf32> to vector<1xf32>
    %46 = vector.shape_cast %45 : vector<1xf32> to vector<1x1x1xf32>
    %47 = vector.extract %46[0, 0, 0] : f32 from vector<1x1x1xf32>
    %48 = tpu.iota {dimensions = array<i32: 1>} : vector<1x128xi32>
    %c0_i32 = arith.constant 0 : i32
    %49 = vector.broadcast %c0_i32 : i32 to vector<1x128xi32>
    %50 = arith.cmpi eq, %48, %49 : vector<1x128xi32>
    %cst_17 = arith.constant 0.000000e+00 : f32
    %51 = vector.broadcast %35 : f32 to vector<1x128xf32>
    %52 = vector.broadcast %cst_17 : f32 to vector<1x128xf32>
    %53 = arith.select %50, %51, %52 : vector<1x128xi1>, vector<1x128xf32>
    %c1_i32 = arith.constant 1 : i32
    %54 = vector.broadcast %c1_i32 : i32 to vector<1x128xi32>
    %55 = arith.cmpi eq, %48, %54 : vector<1x128xi32>
    %cst_18 = arith.constant 0.000000e+00 : f32
    %56 = vector.broadcast %41 : f32 to vector<1x128xf32>
    %57 = vector.broadcast %cst_18 : f32 to vector<1x128xf32>
    %58 = arith.select %55, %56, %57 : vector<1x128xi1>, vector<1x128xf32>
    %59 = arith.addf %53, %58 : vector<1x128xf32>
    %c2_i32 = arith.constant 2 : i32
    %60 = vector.broadcast %c2_i32 : i32 to vector<1x128xi32>
    %61 = arith.cmpi eq, %48, %60 : vector<1x128xi32>
    %cst_19 = arith.constant 0.000000e+00 : f32
    %62 = vector.broadcast %47 : f32 to vector<1x128xf32>
    %63 = vector.broadcast %cst_19 : f32 to vector<1x128xf32>
    %64 = arith.select %61, %62, %63 : vector<1x128xi1>, vector<1x128xf32>
    %65 = arith.addf %59, %64 : vector<1x128xf32>
    %c0_20 = arith.constant 0 : index
    %c0_21 = arith.constant 0 : index
    %c0_22 = arith.constant 0 : index
    %66 = vector.load %arg5[%c0_20, %c0_21, %c0_22] : memref<1x1x128xf32, #tpu.memory_space<vmem>>, vector<1x1x128xf32>
    %67 = vector.shape_cast %66 : vector<1x1x128xf32> to vector<1x128xf32>
    %68 = vector.shape_cast %65 : vector<1x128xf32> to vector<1x1x128xf32>
    tpu.vector_store %arg5[%c0_20, %c0_21, %c0_22], %68 {strides = array<i32>} : memref<1x1x128xf32, #tpu.memory_space<vmem>>, vector<1x1x128xf32>,
    return
  }
  func.func @transform_0(%arg0: i32, %arg1: i32) -> (i32, i32, i32) {
    %c0_i32 = arith.constant 0 : i32
    %c0_i32_0 = arith.constant 0 : i32
    return %arg0, %c0_i32, %arg1 : i32, i32, i32
  }
  func.func @transform_1(%arg0: i32, %arg1: i32) -> (i32, i32, i32) {
    %c0_i32 = arith.constant 0 : i32
    %c0_i32_0 = arith.constant 0 : i32
    return %arg0, %c0_i32, %arg1 : i32, i32, i32
  }
  func.func @transform_2(%arg0: i32, %arg1: i32) -> (i32, i32, i32) {
    %c0_i32 = arith.constant 0 : i32
    %c0_i32_0 = arith.constant 0 : i32
    return %arg0, %c0_i32, %arg1 : i32, i32, i32
  }
  func.func @transform_3(%arg0: i32, %arg1: i32) -> (i32, i32, i32) {
    %c0_i32 = arith.constant 0 : i32
    %c0_i32_0 = arith.constant 0 : i32
    return %arg0, %c0_i32, %arg1 : i32, i32, i32
  }
}

</mosaic_0001>

<llo_original>
// kernel: tpu_custom_call.1
$region0: #{tpu_custom_call.1}
  #allocation0 [shape = 'u32[]', space=smem, size = 0x4, offset = 0x4, fixed_abs, tag = 'smem constant byte address 0x4 - core index']
  #allocation1 [shape = 'u32[144,128]{1,0:T(1,128)}', space=vmem, size = 0x12000, scoped, tag = 'internal scratch']
  %s0 = inlined_call_operand.hbm [shape: f32[2,4,256], index: 0, kind: input, shape index: {}]
  %s1 = inlined_call_operand.hbm [shape: s32[2,1,256], index: 1, kind: input, shape index: {}]
  %s2 = inlined_call_operand.hbm [shape: f32[2,1,256], index: 2, kind: output, shape index: {0}]
  %s3 = inlined_call_operand.hbm [shape: f32[2,1,128], index: 3, kind: output, shape index: {1}]
  %4 = xla_tuple %s2, %s3
  %s5 = sld [smem:[#allocation0]]
  $region57: #{tpu_custom_call.1} parent=0
    _
  %s7 = ssub.s32 1, %s5
  %s8 = scalar_select 0, %s7, %s5
  $region1: #{tpu_custom_call.1} parent=0
    #allocation2 [shape = 'u8[8192]{0}', space=vmem, size = 0x2000, scoped, tag = 'input window, operand 0']
    #allocation3 [shape = 's32[2]{0}', space=sflag, size = 0x8, scoped, tag = 'scoped memory for tpu_custom_call.1']
    #allocation4 [shape = 's32[2]{0}', space=sflag, size = 0x8, scoped, tag = 'scoped memory for tpu_custom_call.1']
    #allocation5 [shape = 'u8[2048]{0}', space=vmem, size = 0x800, scoped, tag = 'input window, operand 1']
    #allocation6 [shape = 's32[2]{0}', space=sflag, size = 0x8, scoped, tag = 'scoped memory for tpu_custom_call.1']
    #allocation7 [shape = 'u8[2048]{0}', space=vmem, size = 0x800, scoped, tag = 'output window, operand 0']
    #allocation8 [shape = 'u8[1024]{0}', space=vmem, size = 0x400, scoped, tag = 'output window, operand 1']
    #allocation9 [shape = 's32[2]{0}', space=sflag, size = 0x8, scoped, tag = 'scoped memory for tpu_custom_call.1']
    %9 = vsyncpa [#allocation3], 0
    %s10 = scalar_lea.sflag [#allocation3], 1
    %11 = vsyncpa %s10, 0
    %12 = vsyncpa [#allocation6], 0
    %s13 = scalar_lea.sflag [#allocation6], 1
    %14 = vsyncpa %s13, 0
    %15 = vsyncpa [#allocation4], 0
    %s16 = scalar_lea.sflag [#allocation4], 1
    %17 = vsyncpa %s16, 0
    %18 = vsyncpa [#allocation9], 0
    %s19 = scalar_lea.sflag [#allocation9], 1
    %20 = vsyncpa %s19, 0
    loop: start=0, step=1, limit=4
    $region2: #{tpu_custom_call.1} parent=1 // loop_pre_header
      _
    $region3: #{tpu_custom_call.1} parent=1 // loop_header
      %s22 = sphi 0, %s26
      %p23 = scmp.ge.s32.totalorder %s22, 4
      %s29 = sphi 0, %s41
      %s30 = sphi 0, %s37
      %s31 = sphi 0, %s29
      %s32 = sphi 0, %s30
      %s33 = sphi 0, %s31
      %s34 = sphi 0, %s32
      %s46 = sphi 0, %s48
      %s49 = sphi 0, %s46
      %s50 = sphi 0, %s49
      %s66 = sphi 0, %s50
      %s74 = sphi 0, %s76
      %s77 = sphi 0, %s74
      %s78 = sphi 0, %s77
      %s94 = sphi 0, %s78
      %s102 = sphi 0, %s104
      %s105 = sphi 0, %s102
      %s106 = sphi 0, %s105
      %s122 = sphi 0, %s106
      %s130 = sphi 0, %s132
      %s133 = sphi 0, %s130
      %s134 = sphi 0, %s133
      %s150 = sphi 0, %s134
    $region4: #{tpu_custom_call.1} parent=1 // loop_header_branch
      %25 = sbr.rel (%p23) target = $region8
    $region5: #{tpu_custom_call.1} parent=1 // loop_body
      %s27 = ssub.s32 %s22, 1
      %s28 = ssub.s32 %s22, 2
      %s35 = sadd.s32 1, %s30
      %p36 = scmp.ge.s32.totalorder %s35, 1
      %s37 = scalar_select %p36, 0, %s35
      %s38 = sadd.s32 1, %s29
      %s39 = scalar_select %p36, %s38, %s29
      %p40 = scmp.ge.s32.totalorder %s39, 2
      %s41 = scalar_select %p40, 0, %s39
      %s42 = ssub.s32 %s29, %s41
      %s43 = ssub.s32 %s30, %s37
      %s44 = sor.u32 %s42, %s43
      %p45 = scmp.eq.s32.totalorder %s44, 0
      %s47 = sadd.s32 %s46, 1
      %s48 = scalar_select %p45, %s46, %s47
      %p51 = pneg %p45
      %p52 = scmp.eq.s32.totalorder %s22, 1
      %p53 = por %p51, %p52
      %p54 = scmp.ne.s32.totalorder %s46, %s49
      %p55 = scmp.eq.s32.totalorder %s22, 0
      %p56 = por %p54, %p55
      %p57 = scmp.ne.s32.totalorder %s46, %s49
      %p58 = scmp.eq.s32.totalorder %s27, 1
      %p59 = por %p57, %p58
      %p60 = scmp.ne.s32.totalorder %s49, %s50
      %p61 = scmp.eq.s32.totalorder %s27, 0
      %p62 = por %p60, %p61
      %p63 = scmp.ne.s32.totalorder %s49, %s50
      %p64 = scmp.eq.s32.totalorder %s28, 1
      %p65 = por %p63, %p64
      %p67 = scmp.ne.s32.totalorder %s50, %s66
      %p68 = scmp.eq.s32.totalorder %s28, 0
      %p69 = por %p67, %p68
      %s70 = ssub.s32 %s29, %s41
      %s71 = ssub.s32 %s30, %s37
      %s72 = sor.u32 %s70, %s71
      %p73 = scmp.eq.s32.totalorder %s72, 0
      %s75 = sadd.s32 %s74, 1
      %s76 = scalar_select %p73, %s74, %s75
      %p79 = pneg %p73
      %p80 = scmp.eq.s32.totalorder %s22, 1
      %p81 = por %p79, %p80
      %p82 = scmp.ne.s32.totalorder %s74, %s77
      %p83 = scmp.eq.s32.totalorder %s22, 0
      %p84 = por %p82, %p83
      %p85 = scmp.ne.s32.totalorder %s74, %s77
      %p86 = scmp.eq.s32.totalorder %s27, 1
      %p87 = por %p85, %p86
      %p88 = scmp.ne.s32.totalorder %s77, %s78
      %p89 = scmp.eq.s32.totalorder %s27, 0
      %p90 = por %p88, %p89
      %p91 = scmp.ne.s32.totalorder %s77, %s78
      %p92 = scmp.eq.s32.totalorder %s28, 1
      %p93 = por %p91, %p92
      %p95 = scmp.ne.s32.totalorder %s78, %s94
      %p96 = scmp.eq.s32.totalorder %s28, 0
      %p97 = por %p95, %p96
      %s98 = ssub.s32 %s29, %s41
      %s99 = ssub.s32 %s30, %s37
      %s100 = sor.u32 %s98, %s99
      %p101 = scmp.eq.s32.totalorder %s100, 0
      %s103 = sadd.s32 %s102, 1
      %s104 = scalar_select %p101, %s102, %s103
      %p107 = pneg %p101
      %p108 = scmp.eq.s32.totalorder %s22, 1
      %p109 = por %p107, %p108
      %p110 = scmp.ne.s32.totalorder %s102, %s105
      %p111 = scmp.eq.s32.totalorder %s22, 0
      %p112 = por %p110, %p111
      %p113 = scmp.ne.s32.totalorder %s102, %s105
      %p114 = scmp.eq.s32.totalorder %s27, 1
      %p115 = por %p113, %p114
      %p116 = scmp.ne.s32.totalorder %s105, %s106
      %p117 = scmp.eq.s32.totalorder %s27, 0
      %p118 = por %p116, %p117
      %p119 = scmp.ne.s32.totalorder %s105, %s106
      %p120 = scmp.eq.s32.totalorder %s28, 1
      %p121 = por %p119, %p120
      %p123 = scmp.ne.s32.totalorder %s106, %s122
      %p124 = scmp.eq.s32.totalorder %s28, 0
      %p125 = por %p123, %p124
      %s126 = ssub.s32 %s29, %s41
      %s127 = ssub.s32 %s30, %s37
      %s128 = sor.u32 %s126, %s127
      %p129 = scmp.eq.s32.totalorder %s128, 0
      %s131 = sadd.s32 %s130, 1
      %s132 = scalar_select %p129, %s130, %s131
      %p135 = pneg %p129
      %p136 = scmp.eq.s32.totalorder %s22, 1
      %p137 = por %p135, %p136
      %p138 = scmp.ne.s32.totalorder %s130, %s133
      %p139 = scmp.eq.s32.totalorder %s22, 0
      %p140 = por %p138, %p139
      %p141 = scmp.ne.s32.totalorder %s130, %s133
      %p142 = scmp.eq.s32.totalorder %s27, 1
      %p143 = por %p141, %p142
      %p144 = scmp.ne.s32.totalorder %s133, %s134
      %p145 = scmp.eq.s32.totalorder %s27, 0
      %p146 = por %p144, %p145
      %p147 = scmp.ne.s32.totalorder %s133, %s134
      %p148 = scmp.eq.s32.totalorder %s28, 1
      %p149 = por %p147, %p148
      %p151 = scmp.ne.s32.totalorder %s134, %s150
      %p152 = scmp.eq.s32.totalorder %s28, 0
      %p153 = por %p151, %p152
      %p154 = scmp.le.s32.totalorder 1, %s22
      %p155 = scmp.lt.s32.totalorder %s22, 3
      %p156 = pnand %p154, %p155
      %p157 = pneg %p156
      // Predicated region
      $region9: #{tpu_custom_call.1} parent=5 // pred_check
        _
      $region10: #{tpu_custom_call.1} parent=5 // pred_check_branch
        %159 = sbr.rel (%p156) target = $region12
      $region11: #{tpu_custom_call.1} parent=5 // pred_region
        %s160 = ssub.s32 %s22, 1
      $region12: #{tpu_custom_call.1} parent=5 // pred_fallthru
        _
      %p161 = scmp.lt.s32.totalorder %s22, 2
      // Predicated region
      $region13: #{tpu_custom_call.1} parent=5 // pred_check
        %p162 = pneg %p161
      $region14: #{tpu_custom_call.1} parent=5 // pred_check_branch
        %164 = sbr.rel (%p162) target = $region16
      $region15: #{tpu_custom_call.1} parent=5 // pred_region
        // Predicated region
        $region17: #{tpu_custom_call.1} parent=15 // pred_check
          %p165 = pneg %p56
        $region18: #{tpu_custom_call.1} parent=15 // pred_check_branch
          %167 = sbr.rel (%p165) target = $region20
        $region19: #{tpu_custom_call.1} parent=15 // pred_region
          %s168 = sand.u32 %s46, 1
          %s169 = scalar_lea.sflag [#allocation3], %s168
          %s170 = sand.u32 %s46, 1
          %s171 = smul.addr %s170, 8
          %s172 = scalar_lea.vmem [#allocation2], %s171
          %s173 = smul.u32 2, %s30
          %s175 = ssub.s32 128, 128
          %176 = vsyncadd %s169, %s175
          %s177 = smul.addr %s29, 2
          %s178 = sadd.s32 %s173, %s177
          %s179 = smul.addr %s178, 64
          %s180 = scalar_lea.hbm %s0, %s179
          %s182 = sshll.u32 %s172, 4
          %s183 = int_to_ptr.vmem [resolvable:$true] %s182
          %185 = dma.hbm_to_vmem [thread:$0]  %s180, 128, %s183, %s169
        $region20: #{tpu_custom_call.1} parent=15 // pred_fallthru
          _
        // Predicated region
        $region21: #{tpu_custom_call.1} parent=15 // pred_check
          %p186 = pneg %p84
        $region22: #{tpu_custom_call.1} parent=15 // pred_check_branch
          %188 = sbr.rel (%p186) target = $region24
        $region23: #{tpu_custom_call.1} parent=15 // pred_region
          %s189 = sand.u32 %s74, 1
          %s190 = scalar_lea.sflag [#allocation6], %s189
          %s191 = sand.u32 %s74, 1
          %s192 = smul.addr %s191, 2
          %s193 = scalar_lea.vmem [#allocation5], %s192
          %s194 = smul.u32 2, %s30
          %s196 = ssub.s32 32, 32
          %197 = vsyncadd %s190, %s196
          %s198 = smul.addr %s29, 2
          %s199 = sadd.s32 %s194, %s198
          %s200 = smul.addr %s199, 16
          %s201 = scalar_lea.hbm %s1, %s200
          %s203 = sshll.u32 %s193, 4
          %s204 = int_to_ptr.vmem [resolvable:$true] %s203
          %206 = dma.hbm_to_vmem [thread:$0]  %s201, 32, %s204, %s190
        $region24: #{tpu_custom_call.1} parent=15 // pred_fallthru
          _
      $region16: #{tpu_custom_call.1} parent=5 // pred_fallthru
        _
      %p207 = scmp.le.s32.totalorder 1, %s22
      %p208 = scmp.lt.s32.totalorder %s22, 3
      %p209 = pnand %p207, %p208
      %p210 = pneg %p209
      // Predicated region
      $region25: #{tpu_custom_call.1} parent=5 // pred_check
        _
      $region26: #{tpu_custom_call.1} parent=5 // pred_check_branch
        %212 = sbr.rel (%p209) target = $region28
      $region27: #{tpu_custom_call.1} parent=5 // pred_region
        %s213 = ssub.s32 %s22, 1
        %s214 = sand.u32 %s49, 1
        %s215 = scalar_lea.sflag [#allocation3], %s214
        %s216 = sand.u32 %s49, 1
        %s217 = smul.addr %s216, 8
        %s218 = scalar_lea.vmem [#allocation2], %s217
        // Predicated region
        $region29: #{tpu_custom_call.1} parent=27 // pred_check
          %p219 = pneg %p62
        $region30: #{tpu_custom_call.1} parent=27 // pred_check_branch
          %221 = sbr.rel (%p219) target = $region32
        $region31: #{tpu_custom_call.1} parent=27 // pred_region
          %222 = dma.done %s215, 128
        $region32: #{tpu_custom_call.1} parent=27 // pred_fallthru
          _
        %s223 = sand.u32 %s77, 1
        %s224 = scalar_lea.sflag [#allocation6], %s223
        %s225 = sand.u32 %s77, 1
        %s226 = smul.addr %s225, 2
        %s227 = scalar_lea.vmem [#allocation5], %s226
        // Predicated region
        $region33: #{tpu_custom_call.1} parent=27 // pred_check
          %p228 = pneg %p90
        $region34: #{tpu_custom_call.1} parent=27 // pred_check_branch
          %230 = sbr.rel (%p228) target = $region36
        $region35: #{tpu_custom_call.1} parent=27 // pred_region
          %231 = dma.done %s224, 32
        $region36: #{tpu_custom_call.1} parent=27 // pred_fallthru
          _
        %s232 = sand.u32 %s49, 1
        %s233 = scalar_lea.sflag [#allocation3], %s232
        %s234 = sand.u32 %s49, 1
        %s235 = smul.addr %s234, 8
        %s236 = scalar_lea.vmem [#allocation2], %s235
        %p237 = pneg %p62
        %p238 = pneg %p59
        %s239 = sand.u32 %s77, 1
        %s240 = scalar_lea.sflag [#allocation6], %s239
        %s241 = sand.u32 %s77, 1
        %s242 = smul.addr %s241, 2
        %s243 = scalar_lea.vmem [#allocation5], %s242
        %p244 = pneg %p90
        %p245 = pneg %p87
        %p246 = pneg %p118
        %p247 = pneg %p115
        %s248 = sand.u32 %s105, 1
        %s249 = scalar_lea.sflag [#allocation4], %s248
        %s250 = sand.u32 %s105, 1
        %s251 = smul.addr %s250, 2
        %s252 = scalar_lea.vmem [#allocation7], %s251
        %p253 = pneg %p146
        %p254 = pneg %p143
        %s255 = sand.u32 %s133, 1
        %s256 = scalar_lea.sflag [#allocation9], %s255
        %s257 = sand.u32 %s133, 1
        %s258 = scalar_lea.vmem [#allocation8], %s257
        %s259 = smul.u32 2, %s32
        %s260 = smul.u32 2, %s32
        %s261 = smul.u32 2, %s32
        %v262 = vld [vmem:[%s218] sm:$0xff]
        %v263 = vld [vmem:[%s227] sm:$0x3]
        %v265 = vcombine.high %v262, %v262
        %vm267 = vcmask 1043456
        %v268 = vsel %vm267, %v262, -inf
        %v269 = vrot.slane %v268, 4
        %v270 = vmax.f32 %v268, %v269
        %v271 = vrot.slane %v270, 2
        %v272 = vmax.f32 %v270, %v271
        %v273 = vrot.slane %v272, 1
        %v274 = vmax.f32 %v272, %v273
        %v275 = vsel %vm267, %v265, -inf
        %v276 = vrot.slane %v275, 4
        %v277 = vmax.f32 %v275, %v276
        %v278 = vrot.slane %v277, 2
        %v279 = vmax.f32 %v277, %v278
        %v280 = vrot.slane %v279, 1
        %v281 = vmax.f32 %v279, %v280
        %v284 = vcombine.low %v274, %v281
        %v286 = vsub.f32 %v262, %v284
        %v287 = vmul.f32 %v286, 1.442695
        %v288 = vpow.pop %v287
        %v290 = vcombine.high %v288, %v288
        %v292 = vsel %vm267, %v288, 0.0
        %v293 = vrot.slane %v292, 4
        %v294 = vadd.f32 %v292, %v293
        %v295 = vrot.slane %v294, 2
        %v296 = vadd.f32 %v294, %v295
        %v297 = vrot.slane %v296, 1
        %v298 = vadd.f32 %v296, %v297
        %v299 = vsel %vm267, %v290, 0.0
        %v300 = vrot.slane %v299, 4
        %v301 = vadd.f32 %v299, %v300
        %v302 = vrot.slane %v301, 2
        %v303 = vadd.f32 %v301, %v302
        %v304 = vrot.slane %v303, 1
        %v305 = vadd.f32 %v303, %v304
        %v306 = vlog2.pop %v298
        %v307 = vmul.f32 %v306, 0.6931472
        %v308 = vlog2.pop %v305
        %v309 = vmul.f32 %v308, 0.6931472
        %v310 = vadd.f32 %v307, %v274
        %v311 = vadd.f32 %v309, %v281
        %v312 = vlaneseq
        %v313 = vshrl.u32 %v312, 7
        %v314 = vlaneseq
        %v315 = vshrl.u32 %v314, 7
        %v316 = vsub.s32 0, %v315
        %v317 = vrot.slane %v263, %v316
        %v318 = vlaneseq
        %v319 = vshrl.u32 %v318, 7
        %v320 = vsub.s32 1, %v319
        %v321 = vrot.slane %v263, %v320
        %vm322 = vcmp.eq.s32.totalorder %v313, %v317
        %vm323 = vcmp.eq.s32.totalorder %v313, %v321
        %v324 = vsel %vm322, %v262, 0.0
        %v325 = vsel %vm323, %v265, 0.0
        %v326 = vsel %vm267, %v324, 0.0
        %v327 = vrot.slane %v326, 4
        %v328 = vadd.f32 %v326, %v327
        %v329 = vrot.slane %v328, 2
        %v330 = vadd.f32 %v328, %v329
        %v331 = vrot.slane %v330, 1
        %v332 = vadd.f32 %v330, %v331
        %v333 = vsel %vm267, %v325, 0.0
        %v334 = vrot.slane %v333, 4
        %v335 = vadd.f32 %v333, %v334
        %v336 = vrot.slane %v335, 2
        %v337 = vadd.f32 %v335, %v336
        %v338 = vrot.slane %v337, 1
        %v339 = vadd.f32 %v337, %v338
        %vm340 = vcmp.ne.s32.totalorder %v263, 255
        %v341 = vsub.f32 %v310, %v332
        %v342 = vsub.f32 %v311, %v339
        %v345 = vcombine.low %v341, %v342
        %v347 = vunpack.c.l.s4 1966171168
        %v348 = vunpack.c.0.s8 %v347
        %v349 = vlaneseq
        %v350 = vshrl.u32 %v349, 7
        %v351 = vsub.s32 %v348, %v350
        %v352 = vrot.slane %v345, %v351
        %v354 = vunpack.c.l.s4 1966171168
        %v355 = vunpack.c.0.s8 %v354
        %v356 = vlaneseq
        %v357 = vshrl.u32 %v356, 7
        %v358 = vsub.s32 %v355, %v357
        %v359 = vrot.slane %v352, %v358
        %v361 = vsel %vm340, %v359, 0.0
        %v362 = vlaneseq
        %vm363 = vcmp.ge.s32.totalorder %v362, 0
        %vm364 = vcmp.lt.s32.totalorder %v362, 256
        %vm365 = vmand %vm363, %vm364
        %366 = vst.msk [vmem:[%s252] sm:$0x3] %vm365, %v361
        %vm367 = vcmp.gt.f32.partialorder %v361, 0.35667494
        %v368 = vsel %vm367, %v361, 0.0
        %v370 = vlaneseq
        %v371 = vshrl.u32 %v370, 7
        %v372 = vsub.s32 0, %v371
        %v373 = vrot.slane %v368, %v372
        %v374 = vlaneseq
        %v375 = vshrl.u32 %v374, 7
        %v376 = vsub.s32 1, %v375
        %v377 = vrot.slane %v368, %v376
        %vm380 = vcmask 1040384
        %v381 = vsel %vm380, %v373, 0.0
        %v382 = vsel %vm380, %v377, 0.0
        %v383 = vadd.f32 %v381, %v382
        %384 = vadd.xlane.f32.xlu0 %v383
        %v385 = vpop.xlane.xlu0 %384
        %v386 = vrot.slane %v385, 4
        %v387 = vadd.f32 %v385, %v386
        %v388 = vrot.slane %v387, 2
        %v389 = vadd.f32 %v387, %v388
        %v390 = vrot.slane %v389, 1
        %v391 = vadd.f32 %v389, %v390
        %s392 = vtos %v391
        %v393 = vsel %vm367, 1, 0
        %v394 = vcvt.s32.f32 %v393
        %v396 = vlaneseq
        %v397 = vshrl.u32 %v396, 7
        %v398 = vsub.s32 0, %v397
        %v399 = vrot.slane %v394, %v398
        %v400 = vlaneseq
        %v401 = vshrl.u32 %v400, 7
        %v402 = vsub.s32 1, %v401
        %v403 = vrot.slane %v394, %v402
        %v406 = vsel %vm380, %v399, 0.0
        %v407 = vsel %vm380, %v403, 0.0
        %v408 = vadd.f32 %v406, %v407
        %409 = vadd.xlane.f32.xlu0 %v408
        %v410 = vpop.xlane.xlu0 %409
        %v411 = vrot.slane %v410, 4
        %v412 = vadd.f32 %v410, %v411
        %v413 = vrot.slane %v412, 2
        %v414 = vadd.f32 %v412, %v413
        %v415 = vrot.slane %v414, 1
        %v416 = vadd.f32 %v414, %v415
        %s417 = vtos %v416
        %v418 = vsel %vm340, 1, 0
        %v419 = vcvt.s32.f32 %v418
        %v421 = vlaneseq
        %v422 = vshrl.u32 %v421, 7
        %v423 = vsub.s32 0, %v422
        %v424 = vrot.slane %v419, %v423
        %v425 = vlaneseq
        %v426 = vshrl.u32 %v425, 7
        %v427 = vsub.s32 1, %v426
        %v428 = vrot.slane %v419, %v427
        %v431 = vsel %vm380, %v424, 0.0
        %v432 = vsel %vm380, %v428, 0.0
        %v433 = vadd.f32 %v431, %v432
        %434 = vadd.xlane.f32.xlu0 %v433
        %v435 = vpop.xlane.xlu0 %434
        %v436 = vrot.slane %v435, 4
        %v437 = vadd.f32 %v435, %v436
        %v438 = vrot.slane %v437, 2
        %v439 = vadd.f32 %v437, %v438
        %v440 = vrot.slane %v439, 1
        %v441 = vadd.f32 %v439, %v440
        %s442 = vtos %v441
        %v443 = vlaneseq
        %v444 = vand.u32 %v443, 127
        %vm445 = vcmp.eq.s32.totalorder %v444, 0
        %v446 = vstv %s392
        %v447 = vsel %vm445, %v446, 0.0
        %vm448 = vcmp.eq.s32.totalorder %v444, 1
        %v449 = vstv %s417
        %v450 = vsel %vm448, %v449, 0.0
        %v451 = vadd.f32 %v447, %v450
        %vm452 = vcmp.eq.s32.totalorder %v444, 2
        %v453 = vstv %s442
        %v454 = vsel %vm452, %v453, 0.0
        %v455 = vadd.f32 %v451, %v454
        %456 = vst [vmem:[%s258] sm:$0x1] %v455
        %s457 = sand.u32 %s105, 1
        %s458 = scalar_lea.sflag [#allocation4], %s457
        %s459 = sand.u32 %s105, 1
        %s460 = smul.addr %s459, 2
        %s461 = scalar_lea.vmem [#allocation7], %s460
        %s462 = sand.u32 %s133, 1
        %s463 = scalar_lea.sflag [#allocation9], %s462
        %s464 = sand.u32 %s133, 1
        %s465 = scalar_lea.vmem [#allocation8], %s464
        // Predicated region
        $region37: #{tpu_custom_call.1} parent=27 // pred_check
          %p466 = pneg %p115
        $region38: #{tpu_custom_call.1} parent=27 // pred_check_branch
          %468 = sbr.rel (%p466) target = $region40
        $region39: #{tpu_custom_call.1} parent=27 // pred_region
          %s469 = smul.u32 2, %s32
          %s471 = ssub.s32 32, 32
          %472 = vsyncadd %s458, %s471
          %s473 = smul.addr %s31, 2
          %s474 = sadd.s32 %s469, %s473
          %s475 = smul.addr %s474, 16
          %s476 = scalar_lea.hbm %s2, %s475
          %s478 = sshll.u32 %s461, 4
          %s479 = int_to_ptr.vmem [resolvable:$true] %s478
          %481 = dma.vmem_to_hbm [thread:$0]  %s479, 32, %s476, %s458
        $region40: #{tpu_custom_call.1} parent=27 // pred_fallthru
          _
        // Predicated region
        $region41: #{tpu_custom_call.1} parent=27 // pred_check
          %p482 = pneg %p143
        $region42: #{tpu_custom_call.1} parent=27 // pred_check_branch
          %484 = sbr.rel (%p482) target = $region44
        $region43: #{tpu_custom_call.1} parent=27 // pred_region
          %s486 = ssub.s32 16, 16
          %487 = vsyncadd %s463, %s486
          %s488 = sadd.s32 %s32, %s31
          %s489 = smul.addr %s488, 16
          %s490 = scalar_lea.hbm %s3, %s489
          %s492 = sshll.u32 %s465, 4
          %s493 = int_to_ptr.vmem [resolvable:$true] %s492
          %495 = dma.vmem_to_hbm [thread:$0]  %s493, 16, %s490, %s463
        $region44: #{tpu_custom_call.1} parent=27 // pred_fallthru
          _
      $region28: #{tpu_custom_call.1} parent=5 // pred_fallthru
        _
      %p496 = scmp.le.s32.totalorder 2, %s22
      // Predicated region
      $region45: #{tpu_custom_call.1} parent=5 // pred_check
        %p497 = pneg %p496
      $region46: #{tpu_custom_call.1} parent=5 // pred_check_branch
        %499 = sbr.rel (%p497) target = $region48
      $region47: #{tpu_custom_call.1} parent=5 // pred_region
        %s500 = ssub.s32 %s22, 2
        // Predicated region
        $region49: #{tpu_custom_call.1} parent=47 // pred_check
          %p501 = pneg %p121
        $region50: #{tpu_custom_call.1} parent=47 // pred_check_branch
          %503 = sbr.rel (%p501) target = $region52
        $region51: #{tpu_custom_call.1} parent=47 // pred_region
          %s504 = sand.u32 %s106, 1
          %s505 = scalar_lea.sflag [#allocation4], %s504
          %s506 = sand.u32 %s106, 1
          %s507 = smul.addr %s506, 2
          %s508 = scalar_lea.vmem [#allocation7], %s507
          %509 = dma.done %s505, 32
        $region52: #{tpu_custom_call.1} parent=47 // pred_fallthru
          _
        // Predicated region
        $region53: #{tpu_custom_call.1} parent=47 // pred_check
          %p510 = pneg %p149
        $region54: #{tpu_custom_call.1} parent=47 // pred_check_branch
          %512 = sbr.rel (%p510) target = $region56
        $region55: #{tpu_custom_call.1} parent=47 // pred_region
          %s513 = sand.u32 %s134, 1
          %s514 = scalar_lea.sflag [#allocation9], %s513
          %s515 = sand.u32 %s134, 1
          %s516 = scalar_lea.vmem [#allocation8], %s515
          %517 = dma.done %s514, 16
        $region56: #{tpu_custom_call.1} parent=47 // pred_fallthru
          _
      $region48: #{tpu_custom_call.1} parent=5 // pred_fallthru
        _
    $region6: #{tpu_custom_call.1} parent=1 // loop_footer
      %s26 = sadd.s32 1, %s22
    $region7: #{tpu_custom_call.1} parent=1 // loop_footer_branch
      %21 = sbr.rel target = $region3
    $region8: #{tpu_custom_call.1} parent=1 // loop_exit
      _
    %518 = vsyncpa [#allocation3], 1
    %s519 = scalar_lea.sflag [#allocation3], 1
    %520 = vsyncpa %s519, 1
    %521 = vsyncpa [#allocation6], 1
    %s522 = scalar_lea.sflag [#allocation6], 1
    %523 = vsyncpa %s522, 1
    %524 = vsyncpa [#allocation4], 1
    %s525 = scalar_lea.sflag [#allocation4], 1
    %526 = vsyncpa %s525, 1
    %527 = vsyncpa [#allocation9], 1
    %s528 = scalar_lea.sflag [#allocation9], 1
    %529 = vsyncpa %s528, 1

</llo_original>
